<compile_context>
chip_gen: v7x
topology: tpu7x:2x2x1
jax: 0.10.0
libtpu: 0.0.40
codegen_flags: <defaults>
</compile_context>

<pallas_src>
import math
import functools

import jax
import jax.numpy as jnp
import numpy as np
from jax import lax
from jax.experimental import pallas as pl
from jax.experimental.pallas import tpu as pltpu

_MIB = 1024 * 1024


# ---- activations (jnp equivalents of _ACTIVATIONS_BY_NAME) ------------------
_ACTIVATIONS = {
    "linear": lambda x: x,
    "relu": lambda x: jnp.maximum(x, 0.0),
    "relu6": lambda x: jnp.clip(x, 0.0, 6.0),
    "gelu": lambda x: x * 0.5 * (1.0 + lax.erf(x / math.sqrt(2.0))),
    "gelu_python": lambda x: x * 0.5 * (1.0 + lax.erf(x / math.sqrt(2.0))),
    "gelu_new": lambda x: x * 0.5 * (1.0 + jnp.tanh(
        math.sqrt(2.0 / math.pi) * (x + 0.044715 * x * x * x))),
    "gelu_pytorch_tanh": lambda x: x * 0.5 * (1.0 + jnp.tanh(
        math.sqrt(2.0 / math.pi) * (x + 0.044715 * x * x * x))),
    "gelu_fast": lambda x: x * 0.5 * (1.0 + jnp.tanh(
        x * 0.7978845608 * (1.0 + 0.044715 * x * x))),
    "quick_gelu": lambda x: x * jax.nn.sigmoid(1.702 * x),
    "silu": lambda x: x * jax.nn.sigmoid(x),
    "swish": lambda x: x * jax.nn.sigmoid(x),
    "sigmoid": jax.nn.sigmoid,
    "tanh": jnp.tanh,
    # TODO(synk): 'prelu' has a learned slope parameter; not representable as a
    # parameter-free activation here.
}

# contract the last dim of lhs with the last dim of rhs (i.e. lhs @ rhs.T,
# MXU-native, no materialized transpose — same pattern as q.kT in flash attn)
_CONTRACT_LAST = (((1,), (1,)), ((), ()))


def _cdiv(a, b):
    return -(-a // b)


def _round_up(x, m):
    return _cdiv(x, m) * m


def _vmem_capacity_bytes():
    """Physical per-core VMEM capacity; conservative 64 MiB fallback."""
    try:
        info = pltpu.get_tpu_info()
        for name in ("vmem_capacity_bytes", "vmem_size_bytes", "vmem_bytes"):
            v = getattr(info, name, None)
            if v:
                return int(v)
    except Exception:
        pass
    return 64 * _MIB


# ---- kernels -----------------------------------------------------------------
def _ffn_resident_kernel(x_ref, wi_ref, wo_ref, o_ref, *, act_fn):
    """Weights fully resident in VMEM (single copy); one MXU pass per M-tile."""
    # (tm, D) x (H, D) -> (tm, H)   [contract D with D]
    inter = lax.dot_general(x_ref[...], wi_ref[...], _CONTRACT_LAST,
                            preferred_element_type=jnp.float32)
    inter = act_fn(inter)
    # (tm, H) x (D, H) -> (tm, D)   [contract H with H]
    out = lax.dot_general(inter.astype(wo_ref.dtype), wo_ref[...], _CONTRACT_LAST,
                          preferred_element_type=jnp.float32)
    o_ref[...] = out.astype(o_ref.dtype)


def _ffn_split_kernel(x_ref, wi_ref, wo_ref, o_ref, *scratch, act_fn):
    """Hidden dim split across the second grid axis.

    If no scratch is passed the output dtype is f32 and we accumulate directly
    into o_ref (its block index is constant across the h axis, so it stays
    resident in VMEM); otherwise an f32 VMEM accumulator is used.
    """
    acc_ref = scratch[0] if scratch else o_ref
    h = pl.program_id(1)

    # (tm, D) x (th, D) -> (tm, th)
    inter = lax.dot_general(x_ref[...], wi_ref[...], _CONTRACT_LAST,
                            preferred_element_type=jnp.float32)
    inter = act_fn(inter)
    # (tm, th) x (D, th) -> (tm, D)
    contrib = lax.dot_general(inter.astype(wo_ref.dtype), wo_ref[...],
                              _CONTRACT_LAST, preferred_element_type=jnp.float32)

    @pl.when(h == 0)
    def _():
        acc_ref[...] = contrib.astype(acc_ref.dtype)

    @pl.when(h > 0)
    def _():
        acc_ref[...] += contrib.astype(acc_ref.dtype)

    if scratch:  # static (trace-time) branch: separate accumulator, cast out at the end
        @pl.when(h == pl.num_programs(1) - 1)
        def _():
            o_ref[...] = acc_ref[...].astype(o_ref.dtype)


# ---- tiling / VMEM-budget selection ------------------------------------------
def _select_config(M, D, H, itemsize, out_itemsize, direct_acc, sub,
                   tm_req, th_req, weight_resident_bytes, vmem_budget):
    """Returns (weights_resident, tm, th_or_None, working_set_estimate_bytes)."""
    cast_extra = itemsize if itemsize < 4 else 0          # bf16 copy of the f32 intermediate
    tm_cap = max(sub, _round_up(min(tm_req, _round_up(M, sub)), sub))

    weight_bytes = 2 * H * D * itemsize                   # wi + wo, single VMEM copy

    def est_r(tm_):
        return (2 * tm_ * D * itemsize                    # x tile (double-buffered)
                + 2 * tm_ * D * out_itemsize              # out tile (double-buffered)
                + weight_bytes                            # resident weights (not double-buffered)
                + tm_ * H * (4 + cast_extra))             # f32 (tm, H) intermediate

    if weight_bytes <= weight_resident_bytes:
        tm = tm_cap
        while est_r(tm) > vmem_budget and tm > sub:
            tm = max(sub, _round_up(tm // 2, sub))
        # Only accept the resident mode if the (tm, H) intermediate did not force
        # an MXU-starving M tile; otherwise fall through to the split mode.
        if est_r(tm) <= vmem_budget and tm >= min(tm_cap, 64):
            return True, tm, None, est_r(tm)

    # hidden-split mode: th multiple of 128 (lane tile); floor keeps the strided
    # (D, th) wo-tile DMA chunks large enough (>=1 KiB), worst case on v5e.
    th_cap = max(128, _round_up(min(th_req, _round_up(H, 128)), 128))
    th_min = min(th_cap, 512 if itemsize <= 2 else 256)

    def est_s(tm_, th_):
        return (2 * tm_ * D * itemsize                    # x tile
                + 2 * tm_ * D * out_itemsize              # out tile
                + 4 * th_ * D * itemsize                  # wi + wo tiles, double-buffered
                + (0 if direct_acc else tm_ * D * 4)      # f32 accumulator scratch
                + tm_ * th_ * (4 + cast_extra))           # f32 (tm, th) intermediate

    tm, th = tm_cap, th_cap
    while est_s(tm, th) > vmem_budget and (tm > sub or th > 128):
        if th > th_min:
            th = max(th_min, _round_up(th // 2, 128))
        elif tm > sub:
            tm = max(sub, _round_up(tm // 2, sub))
        else:
            th = max(128, _round_up(th // 2, 128))        # last resort: go below th_min
    return False, tm, th, est_s(tm, th)


# ---- public entry point --------------------------------------------------------
def dense_act_dense(x, wi, wo, *, activation_fn="gelu_new",
                    tm=None, th=None, compute_dtype=None,
                    weight_resident_bytes=None):
    """Fused T5 FFN.  x: (B, S, D); wi: (H, D); wo: (D, H).  Returns (B, S, D).

    For production use, compute_dtype=jnp.bfloat16 is strongly recommended
    (bf16 MXU rate, half the weight DMA/VMEM, f32 accumulation); the default
    keeps the input dtype so results match the PyTorch reference bit-for-bit
    modulo f32 matmul accumulation order.
    """
    B, S, D = x.shape
    H, D2 = wi.shape
    assert D2 == D and wo.shape == (D, H), "weight shapes must match PyTorch layout"

    out_dtype = x.dtype
    if compute_dtype is not None:
        x = x.astype(compute_dtype)
        wi = wi.astype(compute_dtype)
        wo = wo.astype(compute_dtype)
    itemsize = jnp.dtype(x.dtype).itemsize
    out_itemsize = jnp.dtype(out_dtype).itemsize
    direct_acc = jnp.dtype(out_dtype) == jnp.dtype(jnp.float32)
    sub = max(8, 32 // itemsize)                     # sublane rows: 8 f32 / 16 bf16 / 32 int8

    if tm is None:
        tm = 512 if itemsize >= 4 else 1024          # split mode is weight-DMA bound ~ M/tm
    if th is None:
        th = 512

    # Generation-aware VMEM budget (v7x: 64 MiB physical; v5e/v6e: 128 MiB).
    capacity = _vmem_capacity_bytes()
    if capacity <= 64 * _MIB:
        budget = max(24 * _MIB, capacity - 16 * _MIB)        # ~48 MiB on v7x
        limit_ceiling = capacity - 8 * _MIB                  # never request the full 64 MiB
    else:
        budget = max(24 * _MIB, capacity - 24 * _MIB)        # ~104 MiB on v5e/v6e
        limit_ceiling = capacity - 16 * _MIB
    if weight_resident_bytes is None:
        weight_resident_bytes = budget - 8 * _MIB            # ~96 MiB v5e/v6e, ~40 MiB v7x

    act_fn = _ACTIVATIONS[activation_fn]
    M = B * S
    x2 = x.reshape(M, D)

    resident, tm_eff, th_eff, est = _select_config(
        M, D, H, itemsize, out_itemsize, direct_acc, sub, tm, th,
        weight_resident_bytes, budget)

    # Megacore: give the "parallel" M axis at least two tiles (v7x has 2 TCs).
    if M > sub and _cdiv(M, tm_eff) < 2:
        tm_eff = max(sub, _round_up(_cdiv(M, 2), sub))

    grid_m = _cdiv(M, tm_eff)   # partial last M block handled by Pallas (no host pad/slice)

    vmem_limit = int(min(limit_ceiling, max(32 * _MIB, est * 5 // 4)))

    if resident:
        grid = (grid_m,)
        in_specs = [
            pl.BlockSpec((tm_eff, D), lambda i: (i, 0)),               # x tile
            pl.BlockSpec(memory_space=pltpu.MemorySpace.VMEM),         # wi resident, single copy
            pl.BlockSpec(memory_space=pltpu.MemorySpace.VMEM),         # wo resident, single copy
        ]
        out_spec = pl.BlockSpec((tm_eff, D), lambda i: (i, 0))
        scratch = []
        sem = ("parallel",)
        kernel = functools.partial(_ffn_resident_kernel, act_fn=act_fn)
    else:
        # Pad H (weights only) up to a whole number of th tiles; the zero wo
        # columns make the padded hidden units contribute exactly zero even for
        # activations with act(0) != 0.
        H_pad = _round_up(H, th_eff)
        if H_pad != H:
            wi = jnp.pad(wi, ((0, H_pad - H), (0, 0)))
            wo = jnp.pad(wo, ((0, 0), (0, H_pad - H)))
        grid = (grid_m, H_pad // th_eff)
        in_specs = [
            pl.BlockSpec((tm_eff, D), lambda i, h: (i, 0)),   # x tile (held across h)
            pl.BlockSpec((th_eff, D), lambda i, h: (h, 0)),   # wi rows (contiguous)
            pl.BlockSpec((D, th_eff), lambda i, h: (0, h)),   # wo columns
        ]
        out_spec = pl.BlockSpec((tm_eff, D), lambda i, h: (i, 0))
        scratch = [] if direct_acc else [pltpu.VMEM((tm_eff, D), jnp.float32)]
        sem = ("parallel", "arbitrary")
        kernel = functools.partial(_ffn_split_kernel, act_fn=act_fn)

    out2 = pl.pallas_call(
        kernel,
        out_shape=jax.ShapeDtypeStruct((M, D), out_dtype),
        grid_spec=pltpu.PrefetchScalarGridSpec(
            num_scalar_prefetch=0,
            grid=grid,
            in_specs=in_specs,
            out_specs=out_spec,
            scratch_shapes=scratch),
        compiler_params=pltpu.CompilerParams(
            dimension_semantics=sem,
            vmem_limit_bytes=vmem_limit),
    )(x2, wi, wo)

    return out2.reshape(B, S, D)


# ---- reference (plain JAX) -----------------------------------------------------
def dense_act_dense_ref(x, wi, wo, *, activation_fn="gelu_new"):
    act_fn = _ACTIVATIONS[activation_fn]
    h = jnp.einsum("bsd,hd->bsh", x, wi)
    h = act_fn(h)
    return jnp.einsum("bsh,dh->bsd", h, wo)


if __name__ == "__main__":
    # small shapes consistent with the module: batch=2, seq=8, dim=32, hidden=64
    B, S, D, H = 2, 8, 32, 64
    dtype = jnp.float32
    activation_fn = "gelu_new"

    key = jax.random.PRNGKey(0)
    kx, kwi, kwo, kwi2, kwo2 = jax.random.split(key, 5)
    x = jax.random.normal(kx, (B, S, D), dtype=dtype)
    # deterministic synthetic parameters (no checkpoint load)
    wi = jax.random.normal(kwi, (H, D), dtype=dtype) * (1.0 / math.sqrt(D))
    wo = jax.random.normal(kwo, (D, H), dtype=dtype) * (1.0 / math.sqrt(H))

    ref = dense_act_dense_ref(x, wi, wo, activation_fn=activation_fn)

    # 1) default path: weights VMEM-resident (single-buffered), M split into
    #    two tiles so the "parallel" axis can feed both v7x TensorCores.
    out = jax.block_until_ready(dense_act_dense(x, wi, wo, activation_fn=activation_fn))
    np.testing.assert_allclose(np.asarray(out), np.asarray(ref), rtol=1e-5, atol=1e-5)

    # 2) forced hidden-split path: exercises the zero-padding of H up to the
    #    128-lane weight tile (single h step) and direct accumulation into o_ref.
    out2 = jax.block_until_ready(dense_act_dense(
        x, wi, wo, activation_fn=activation_fn, weight_resident_bytes=0, th=128))
    np.testing.assert_allclose(np.asarray(out2), np.asarray(ref), rtol=1e-5, atol=1e-5)

    # 3) forced hidden-split with a real multi-step reduction (H2=256, th=128),
    #    f32 output -> accumulates directly into o_ref (no scratch).
    H2 = 256
    wi2 = jax.random.normal(kwi2, (H2, D), dtype=dtype) * (1.0 / math.sqrt(D))
    wo2 = jax.random.normal(kwo2, (D, H2), dtype=dtype) * (1.0 / math.sqrt(H2))
    ref3 = dense_act_dense_ref(x, wi2, wo2, activation_fn=activation_fn)
    out3 = jax.block_until_ready(dense_act_dense(
        x, wi2, wo2, activation_fn=activation_fn, weight_resident_bytes=0, th=128))
    np.testing.assert_allclose(np.asarray(out3), np.asarray(ref3), rtol=1e-5, atol=1e-5)

    # 4) bf16 inputs, forced split: exercises the f32 accumulator scratch path,
    #    the bf16 sublane rounding (tm multiple of 16) and the recommended bf16
    #    compute recipe (looser tolerance due to bf16 rounding of activations).
    xb = x.astype(jnp.bfloat16)
    wib = wi2.astype(jnp.bfloat16)
    wob = wo2.astype(jnp.bfloat16)
    ref4 = dense_act_dense_ref(xb.astype(jnp.float32), wib.astype(jnp.float32),
                               wob.astype(jnp.float32), activation_fn=activation_fn)
    out4 = jax.block_until_ready(dense_act_dense(
        xb, wib, wob, activation_fn=activation_fn, weight_resident_bytes=0, th=128))
    np.testing.assert_allclose(np.asarray(out4.astype(jnp.float32)), np.asarray(ref4),
                               rtol=5e-2, atol=5e-2)

    # 5) M not a multiple of the sublane tile: Pallas handles the partial last
    #    block — no host-side pad of x or slice of the output.
    x5 = jax.random.normal(kx, (1, 5, D), dtype=dtype)
    ref5 = dense_act_dense_ref(x5, wi, wo, activation_fn=activation_fn)
    out5 = jax.block_until_ready(dense_act_dense(x5, wi, wo, activation_fn=activation_fn))
    np.testing.assert_allclose(np.asarray(out5), np.asarray(ref5), rtol=1e-5, atol=1e-5)

    print("KERNEL_OK")
</pallas_src>

<mosaic_0001>
module attributes {stable_mosaic.version = 11 : i64} {
  func.func @_ffn_resident_kernel(%arg0: i32, %arg1: memref<8x32xf32, #tpu.memory_space<vmem>>, %arg2: memref<64x32xf32, #tpu.memory_space<vmem>>, %arg3: memref<32x64xf32, #tpu.memory_space<vmem>>, %arg4: memref<8x32xf32, #tpu.memory_space<vmem>>) attributes {dimension_semantics = [#tpu.dimension_semantics<parallel>], iteration_bounds = array<i64: 2>, scalar_prefetch = 0 : i64, scratch_operands = 0 : i64, tpu.core_type = #tpu.core_type<tc>, window_params = [{transform_indices = @transform_0, window_bounds = array<i64: 8, 32>}, {pipeline_mode = #tpu.pipeline_mode<synchronous>, transform_indices = @transform_1, window_bounds = array<i64: 64, 32>}, {pipeline_mode = #tpu.pipeline_mode<synchronous>, transform_indices = @transform_2, window_bounds = array<i64: 32, 64>}, {transform_indices = @transform_3, window_bounds = array<i64: 8, 32>}]} {
    %c0 = arith.constant 0 : index
    %c0_0 = arith.constant 0 : index
    %0 = vector.load %arg1[%c0, %c0_0] : memref<8x32xf32, #tpu.memory_space<vmem>>, vector<8x32xf32>
    %c0_1 = arith.constant 0 : index
    %c0_2 = arith.constant 0 : index
    %1 = vector.load %arg2[%c0_1, %c0_2] : memref<64x32xf32, #tpu.memory_space<vmem>>, vector<64x32xf32>
    %cst = arith.constant dense<0.000000e+00> : vector<8x64xf32>
    %2 = tpu.matmul %0, %1, %cst {dimension_numbers = #tpu.dot_dimension_numbers<[1], [1], [0], [0], [0, 0, 1, 0], [], []>} : vector<8x32xf32>, vector<64x32xf32>, vector<8x64xf32> -> vector<8x64xf32>
    %cst_3 = arith.constant 5.000000e-01 : f32
    %3 = vector.broadcast %cst_3 : f32 to vector<8x64xf32>
    %4 = arith.mulf %2, %3 : vector<8x64xf32>
    %cst_4 = arith.constant 4.471500e-02 : f32
    %5 = vector.broadcast %cst_4 : f32 to vector<8x64xf32>
    %6 = arith.mulf %5, %2 : vector<8x64xf32>
    %7 = arith.mulf %6, %2 : vector<8x64xf32>
    %8 = arith.mulf %7, %2 : vector<8x64xf32>
    %9 = arith.addf %2, %8 : vector<8x64xf32>
    %cst_5 = arith.constant 0.797884583 : f32
    %10 = vector.broadcast %cst_5 : f32 to vector<8x64xf32>
    %11 = arith.mulf %10, %9 : vector<8x64xf32>
    %12 = math.tanh %11 : vector<8x64xf32>
    %cst_6 = arith.constant 1.000000e+00 : f32
    %13 = vector.broadcast %cst_6 : f32 to vector<8x64xf32>
    %14 = arith.addf %13, %12 : vector<8x64xf32>
    %15 = arith.mulf %4, %14 : vector<8x64xf32>
    %c0_7 = arith.constant 0 : index
    %c0_8 = arith.constant 0 : index
    %16 = vector.load %arg3[%c0_7, %c0_8] : memref<32x64xf32, #tpu.memory_space<vmem>>, vector<32x64xf32>
    %cst_9 = arith.constant dense<0.000000e+00> : vector<8x32xf32>
    %17 = tpu.matmul %15, %16, %cst_9 {dimension_numbers = #tpu.dot_dimension_numbers<[1], [1], [0], [0], [0, 0, 1, 0], [], []>} : vector<8x64xf32>, vector<32x64xf32>, vector<8x32xf32> -> vector<8x32xf32>
    %c0_10 = arith.constant 0 : index
    %c0_11 = arith.constant 0 : index
    %18 = vector.load %arg4[%c0_10, %c0_11] : memref<8x32xf32, #tpu.memory_space<vmem>>, vector<8x32xf32>
    tpu.vector_store %arg4[%c0_10, %c0_11], %17 {strides = array<i32>} : memref<8x32xf32, #tpu.memory_space<vmem>>, vector<8x32xf32>,
    return
  }
  func.func @transform_0(%arg0: i32) -> (i32, i32) {
    %c0_i32 = arith.constant 0 : i32
    %c0_i32_0 = arith.constant 0 : i32
    return %arg0, %c0_i32 : i32, i32
  }
  func.func @transform_1(%arg0: i32) -> (i32, i32) {
    %c0_i32 = arith.constant 0 : i32
    %c0_i32_0 = arith.constant 0 : i32
    %c0_i32_1 = arith.constant 0 : i32
    return %c0_i32, %c0_i32_0 : i32, i32
  }
  func.func @transform_2(%arg0: i32) -> (i32, i32) {
    %c0_i32 = arith.constant 0 : i32
    %c0_i32_0 = arith.constant 0 : i32
    %c0_i32_1 = arith.constant 0 : i32
    return %c0_i32, %c0_i32_0 : i32, i32
  }
  func.func @transform_3(%arg0: i32) -> (i32, i32) {
    %c0_i32 = arith.constant 0 : i32
    %c0_i32_0 = arith.constant 0 : i32
    return %arg0, %c0_i32 : i32, i32
  }
}

</mosaic_0001>

<llo_original>
// kernel: tpu_custom_call.1
$region0: #{tpu_custom_call.1}
  #allocation0 [shape = 'u32[]', space=smem, size = 0x4, offset = 0x4, fixed_abs, tag = 'smem constant byte address 0x4 - core index']
  #allocation1 [shape = 'u32[144,128]{1,0:T(1,128)}', space=vmem, size = 0x12000, scoped, tag = 'internal scratch']
  %s0 = inlined_call_operand.vmem [shape: f32[16,32], index: 0, kind: input, shape index: {}]
  %s1 = inlined_call_operand.vmem [shape: f32[64,32], index: 1, kind: input, shape index: {}]
  %s2 = inlined_call_operand.vmem [shape: f32[32,64], index: 2, kind: input, shape index: {}]
  %s3 = inlined_call_operand.hbm [shape: f32[16,32], index: 3, kind: output, shape index: {}]
  %s4 = sld [smem:[#allocation0]]
  $region45: #{tpu_custom_call.1} parent=0
    _
  %s6 = ssub.s32 1, %s4
  %s7 = scalar_select 0, %s6, %s4
  $region1: #{tpu_custom_call.1} parent=0
    #allocation2 [shape = 'u8[8192]{0}', space=vmem, size = 0x2000, scoped, tag = 'output window, operand 0']
    #allocation3 [shape = 's32[2]{0}', space=sflag, size = 0x8, scoped, tag = 'scoped memory for tpu_custom_call.1']
    %8 = vsyncpa [#allocation3], 0
    %s9 = scalar_lea.sflag [#allocation3], 1
    %10 = vsyncpa %s9, 0
    loop: start=0, step=1, limit=4
    $region2: #{tpu_custom_call.1} parent=1 // loop_pre_header
      _
    $region3: #{tpu_custom_call.1} parent=1 // loop_header
      %s12 = sphi 0, %s16
      %p13 = scmp.ge.s32.totalorder %s12, 4
      %s22 = sphi 0, %s24
      %s25 = sphi 0, %s22
      %s26 = sphi 0, %s25
      %s42 = sphi 0, %s26
      %s46 = sphi 0, %s46
      %s48 = sphi 0, %s46
      %s49 = sphi 0, %s48
      %s63 = sphi 0, %s49
      %s67 = sphi 0, %s67
      %s69 = sphi 0, %s67
      %s70 = sphi 0, %s69
      %s84 = sphi 0, %s70
      %s90 = sphi 0, %s92
      %s93 = sphi 0, %s90
      %s94 = sphi 0, %s93
      %s110 = sphi 0, %s94
    $region4: #{tpu_custom_call.1} parent=1 // loop_header_branch
      %15 = sbr.rel (%p13) target = $region8
    $region5: #{tpu_custom_call.1} parent=1 // loop_body
      %s17 = ssub.s32 %s12, 1
      %s18 = ssub.s32 %s12, 2
      %s19 = sadd.s32 %s12, 1
      %s20 = ssub.s32 %s12, %s19
      %p21 = scmp.eq.s32.totalorder %s20, 0
      %s23 = sadd.s32 %s22, 1
      %s24 = scalar_select %p21, %s22, %s23
      %p27 = pneg %p21
      %p28 = scmp.eq.s32.totalorder %s12, 1
      %p29 = por %p27, %p28
      %p30 = scmp.ne.s32.totalorder %s22, %s25
      %p31 = scmp.eq.s32.totalorder %s12, 0
      %p32 = por %p30, %p31
      %p33 = scmp.ne.s32.totalorder %s22, %s25
      %p34 = scmp.eq.s32.totalorder %s17, 1
      %p35 = por %p33, %p34
      %p36 = scmp.ne.s32.totalorder %s25, %s26
      %p37 = scmp.eq.s32.totalorder %s17, 0
      %p38 = por %p36, %p37
      %p39 = scmp.ne.s32.totalorder %s25, %s26
      %p40 = scmp.eq.s32.totalorder %s18, 1
      %p41 = por %p39, %p40
      %p43 = scmp.ne.s32.totalorder %s26, %s42
      %p44 = scmp.eq.s32.totalorder %s18, 0
      %p45 = por %p43, %p44
      %s47 = sadd.s32 %s46, 1
      %p50 = scmp.eq.s32.totalorder %s12, 1
      %p51 = scmp.ne.s32.totalorder %s46, %s48
      %p52 = scmp.eq.s32.totalorder %s12, 0
      %p53 = por %p51, %p52
      %p54 = scmp.ne.s32.totalorder %s46, %s48
      %p55 = scmp.eq.s32.totalorder %s17, 1
      %p56 = por %p54, %p55
      %p57 = scmp.ne.s32.totalorder %s48, %s49
      %p58 = scmp.eq.s32.totalorder %s17, 0
      %p59 = por %p57, %p58
      %p60 = scmp.ne.s32.totalorder %s48, %s49
      %p61 = scmp.eq.s32.totalorder %s18, 1
      %p62 = por %p60, %p61
      %p64 = scmp.ne.s32.totalorder %s49, %s63
      %p65 = scmp.eq.s32.totalorder %s18, 0
      %p66 = por %p64, %p65
      %s68 = sadd.s32 %s67, 1
      %p71 = scmp.eq.s32.totalorder %s12, 1
      %p72 = scmp.ne.s32.totalorder %s67, %s69
      %p73 = scmp.eq.s32.totalorder %s12, 0
      %p74 = por %p72, %p73
      %p75 = scmp.ne.s32.totalorder %s67, %s69
      %p76 = scmp.eq.s32.totalorder %s17, 1
      %p77 = por %p75, %p76
      %p78 = scmp.ne.s32.totalorder %s69, %s70
      %p79 = scmp.eq.s32.totalorder %s17, 0
      %p80 = por %p78, %p79
      %p81 = scmp.ne.s32.totalorder %s69, %s70
      %p82 = scmp.eq.s32.totalorder %s18, 1
      %p83 = por %p81, %p82
      %p85 = scmp.ne.s32.totalorder %s70, %s84
      %p86 = scmp.eq.s32.totalorder %s18, 0
      %p87 = por %p85, %p86
      %s88 = ssub.s32 %s12, %s19
      %p89 = scmp.eq.s32.totalorder %s88, 0
      %s91 = sadd.s32 %s90, 1
      %s92 = scalar_select %p89, %s90, %s91
      %p95 = pneg %p89
      %p96 = scmp.eq.s32.totalorder %s12, 1
      %p97 = por %p95, %p96
      %p98 = scmp.ne.s32.totalorder %s90, %s93
      %p99 = scmp.eq.s32.totalorder %s12, 0
      %p100 = por %p98, %p99
      %p101 = scmp.ne.s32.totalorder %s90, %s93
      %p102 = scmp.eq.s32.totalorder %s17, 1
      %p103 = por %p101, %p102
      %p104 = scmp.ne.s32.totalorder %s93, %s94
      %p105 = scmp.eq.s32.totalorder %s17, 0
      %p106 = por %p104, %p105
      %p107 = scmp.ne.s32.totalorder %s93, %s94
      %p108 = scmp.eq.s32.totalorder %s18, 1
      %p109 = por %p107, %p108
      %p111 = scmp.ne.s32.totalorder %s94, %s110
      %p112 = scmp.eq.s32.totalorder %s18, 0
      %p113 = por %p111, %p112
      %p114 = scmp.le.s32.totalorder 1, %s12
      %p115 = scmp.lt.s32.totalorder %s12, 3
      %p116 = pnand %p114, %p115
      %p117 = pneg %p116
      // Predicated region
      $region9: #{tpu_custom_call.1} parent=5 // pred_check
        _
      $region10: #{tpu_custom_call.1} parent=5 // pred_check_branch
        %119 = sbr.rel (%p116) target = $region12
      $region11: #{tpu_custom_call.1} parent=5 // pred_region
        %s120 = ssub.s32 %s12, 1
        // Predicated region
        $region13: #{tpu_custom_call.1} parent=11 // pred_check
          %p121 = pneg %p59
        $region14: #{tpu_custom_call.1} parent=11 // pred_check_branch
          %123 = sbr.rel (%p121) target = $region16
        $region15: #{tpu_custom_call.1} parent=11 // pred_region
          _
        $region16: #{tpu_custom_call.1} parent=11 // pred_fallthru
          _
        // Predicated region
        $region17: #{tpu_custom_call.1} parent=11 // pred_check
          %p124 = pneg %p80
        $region18: #{tpu_custom_call.1} parent=11 // pred_check_branch
          %126 = sbr.rel (%p124) target = $region20
        $region19: #{tpu_custom_call.1} parent=11 // pred_region
          _
        $region20: #{tpu_custom_call.1} parent=11 // pred_fallthru
          _
      $region12: #{tpu_custom_call.1} parent=5 // pred_fallthru
        _
      %p127 = scmp.lt.s32.totalorder %s12, 2
      // Predicated region
      $region21: #{tpu_custom_call.1} parent=5 // pred_check
        %p128 = pneg %p127
      $region22: #{tpu_custom_call.1} parent=5 // pred_check_branch
        %130 = sbr.rel (%p128) target = $region24
      $region23: #{tpu_custom_call.1} parent=5 // pred_region
        // Predicated region
        $region25: #{tpu_custom_call.1} parent=23 // pred_check
          %p131 = pneg %p32
        $region26: #{tpu_custom_call.1} parent=23 // pred_check_branch
          %133 = sbr.rel (%p131) target = $region28
        $region27: #{tpu_custom_call.1} parent=23 // pred_region
          %p134 = scmp.lt.s32.totalorder %s12, 1
          %s135 = scalar_select %p134, %s12, 1
          %s136 = smul.addr %s135, 8
          %s137 = scalar_lea.vmem %s0, %s136
        $region28: #{tpu_custom_call.1} parent=23 // pred_fallthru
          _
      $region24: #{tpu_custom_call.1} parent=5 // pred_fallthru
        _
      %p138 = scmp.le.s32.totalorder 1, %s12
      %p139 = scmp.lt.s32.totalorder %s12, 3
      %p140 = pnand %p138, %p139
      %p141 = pneg %p140
      // Predicated region
      $region29: #{tpu_custom_call.1} parent=5 // pred_check
        _
      $region30: #{tpu_custom_call.1} parent=5 // pred_check_branch
        %143 = sbr.rel (%p140) target = $region32
      $region31: #{tpu_custom_call.1} parent=5 // pred_region
        %s144 = ssub.s32 %s12, 1
        %p145 = scmp.lt.s32.totalorder %s17, 1
        %s146 = scalar_select %p145, %s17, 1
        %s147 = smul.addr %s146, 8
        %s148 = scalar_lea.vmem %s0, %s147
        %p149 = pneg %p38
        %p150 = pneg %p35
        %p151 = pneg %p59
        %p152 = pneg %p56
        %p153 = pneg %p80
        %p154 = pneg %p77
        %p155 = pneg %p106
        %p156 = pneg %p103
        %s157 = sand.u32 %s93, 1
        %s158 = scalar_lea.sflag [#allocation3], %s157
        %s159 = sand.u32 %s93, 1
        %s160 = smul.addr %s159, 8
        %s161 = scalar_lea.vmem [#allocation2], %s160
        %p162 = scmp.lt.s32.totalorder %s17, 1
        %s163 = scalar_select %p162, %s17, 1
        %s164 = smul.addr %s163, 8
        %s165 = scalar_lea.vmem %s0, %s164
        %v166 = vld [vmem:[%s165] sm:$0xff]
        %v167 = vld [vmem:[%s1] sm:$0xff]
        %v168 = vld [vmem:[%s1 + $0x8] sm:$0xff]
        %v169 = vld [vmem:[%s1 + $0x10] sm:$0xff]
        %v170 = vld [vmem:[%s1 + $0x18] sm:$0xff]
        %v171 = vld [vmem:[%s1 + $0x20] sm:$0xff]
        %v172 = vld [vmem:[%s1 + $0x28] sm:$0xff]
        %v173 = vld [vmem:[%s1 + $0x30] sm:$0xff]
        %v174 = vld [vmem:[%s1 + $0x38] sm:$0xff]
        %vm175 = vcmask 261120
        %v177 = vsel %vm175, %v166, 0
        %v180 = vsel %vm175, %v167, 0
        %v183 = vsel %vm175, %v168, 0
        %v186 = vsel %vm175, %v169, 0
        %v189 = vsel %vm175, %v170, 0
        %v192 = vsel %vm175, %v171, 0
        %v195 = vsel %vm175, %v172, 0
        %v198 = vsel %vm175, %v173, 0
        %v201 = vsel %vm175, %v174, 0
        %203 = vmatprep.subr.mxu0 0.0
        %204 = vmatpush1.xpose.msra.mxu0 %v180
        %205 = vmatprep.subr.mxu0 0.0
        %206 = vmatpush1.xpose.msra.mxu0 %v183
        %207 = vmatprep.subr.mxu0 0.0
        %208 = vmatpush1.xpose.msra.mxu0 %v186
        %209 = vmatprep.subr.mxu0 0.0
        %210 = vmatpush1.xpose.msra.mxu0 %v189
        %211 = vmatprep.subr.mxu0 0.0
        %212 = vmatpush1.xpose.msra.mxu0 %v192
        %213 = vmatprep.subr.mxu0 0.0
        %214 = vmatpush1.xpose.msra.mxu0 %v195
        %215 = vmatprep.subr.mxu0 0.0
        %216 = vmatpush1.xpose.msra.mxu0 %v198
        %217 = vmatprep.subr.mxu0 0.0
        %218 = vmatpush1.xpose.msra.mxu0 %v201
        %219 = vmatprep.subr.mxu0 0.0
        %220 = vmatpush1.xpose.msra.mxu0 0.0
        %221 = vmatprep.subr.mxu0 0.0
        %222 = vmatpush1.xpose.msra.mxu0 0.0
        %223 = vmatprep.subr.mxu0 0.0
        %224 = vmatpush1.xpose.msra.mxu0 0.0
        %225 = vmatprep.subr.mxu0 0.0
        %226 = vmatpush1.xpose.msra.mxu0 0.0
        %227 = vmatprep.subr.mxu0 0.0
        %228 = vmatpush1.xpose.msra.mxu0 0.0
        %229 = vmatprep.subr.mxu0 0.0
        %230 = vmatpush1.xpose.msra.mxu0 0.0
        %231 = vmatprep.subr.mxu0 0.0
        %232 = vmatpush1.xpose.msra.mxu0 0.0
        %233 = vmatprep.subr.mxu0 0.0
        %234 = vmatpush1.xpose.msra.mxu0 0.0
        %235 = vmatprep.subr.mxu0 0.0
        %236 = vmatpush1.xpose.msra.mxu0 0.0
        %237 = vmatprep.subr.mxu0 0.0
        %238 = vmatpush1.xpose.msra.mxu0 0.0
        %239 = vmatprep.subr.mxu0 0.0
        %240 = vmatpush1.xpose.msra.mxu0 0.0
        %241 = vmatprep.subr.mxu0 0.0
        %242 = vmatpush1.xpose.msra.mxu0 0.0
        %243 = vmatprep.subr.mxu0 0.0
        %244 = vmatpush1.xpose.msra.mxu0 0.0
        %245 = vmatprep.subr.mxu0 0.0
        %246 = vmatpush1.xpose.msra.mxu0 0.0
        %247 = vmatprep.subr.mxu0 0.0
        %248 = vmatpush1.xpose.msra.mxu0 0.0
        %249 = vmatprep.subr.mxu0 0.0
        %250 = vmatpush1.xpose.msra.mxu0 0.0
        %251 = vmatprep.subr.mxu0 0.0
        %252 = vmatpush1.xpose.msra.mxu0 0.0
        %253 = vmatprep.subr.mxu0 0.0
        %254 = vmatpush1.xpose.msra.mxu0 0.0
        %255 = vmatprep.subr.mxu0 0.0
        %256 = vmatpush1.xpose.msra.mxu0 0.0
        %257 = vmatprep.subr.mxu0 0.0
        %258 = vmatpush1.xpose.msra.mxu0 0.0
        %259 = vmatprep.subr.mxu0 0.0
        %260 = vmatpush1.xpose.msra.mxu0 0.0
        %261 = vmatprep.subr.mxu0 0.0
        %262 = vmatpush1.xpose.msra.mxu0 0.0
        %263 = vmatprep.subr.mxu0 0.0
        %264 = vmatpush1.xpose.msra.mxu0 0.0
        %265 = vmatprep.subr.mxu0 0.0
        %266 = vmatpush1.xpose.msra.mxu0 0.0
        %267 = vmatprep.mubr.f32.mxu0 0.0
        %268 = vmatmul.mubr.f32.gmra.mrb[0].mxu0 %v177
        %v269 = vpop.f32.mrb[0].mxu0
        %v270 = vadd.f32 0.0, %v269
        %v271 = vpop.f32.mrb[0].mxu0
        %272 = vdwg.mxu0
        %v273 = vmul.f32 %v270, 0.5
        %v274 = vmul.f32 %v270, 0.044715
        %v275 = vmul.f32 %v274, %v270
        %v276 = vmul.f32 %v275, %v270
        %v277 = vadd.f32 %v270, %v276
        %v278 = vmul.f32 %v277, 0.7978846
        %v279 = vtanh.pop %v278
        %v280 = vadd.f32 %v279, 1.0
        %v281 = vmul.f32 %v273, %v280
        %v282 = vld [vmem:[%s2] sm:$0xff]
        %v283 = vld [vmem:[%s2 + $0x8] sm:$0xff]
        %v284 = vld [vmem:[%s2 + $0x10] sm:$0xff]
        %v285 = vld [vmem:[%s2 + $0x18] sm:$0xff]
        %vm286 = vcmask 523264
        %v288 = vsel %vm286, %v281, 0
        %v291 = vsel %vm286, %v282, 0
        %v294 = vsel %vm286, %v283, 0
        %v297 = vsel %vm286, %v284, 0
        %v300 = vsel %vm286, %v285, 0
        %302 = vmatprep.subr.mxu0 0.0
        %303 = vmatpush1.xpose.msra.mxu0 %v291
        %304 = vmatprep.subr.mxu0 0.0
        %305 = vmatpush1.xpose.msra.mxu0 %v294
        %306 = vmatprep.subr.mxu0 0.0
        %307 = vmatpush1.xpose.msra.mxu0 %v297
        %308 = vmatprep.subr.mxu0 0.0
        %309 = vmatpush1.xpose.msra.mxu0 %v300
        %310 = vmatprep.subr.mxu0 0.0
        %311 = vmatpush1.xpose.msra.mxu0 0.0
        %312 = vmatprep.subr.mxu0 0.0
        %313 = vmatpush1.xpose.msra.mxu0 0.0
        %314 = vmatprep.subr.mxu0 0.0
        %315 = vmatpush1.xpose.msra.mxu0 0.0
        %316 = vmatprep.subr.mxu0 0.0
        %317 = vmatpush1.xpose.msra.mxu0 0.0
        %318 = vmatprep.subr.mxu0 0.0
        %319 = vmatpush1.xpose.msra.mxu0 0.0
        %320 = vmatprep.subr.mxu0 0.0
        %321 = vmatpush1.xpose.msra.mxu0 0.0
        %322 = vmatprep.subr.mxu0 0.0
        %323 = vmatpush1.xpose.msra.mxu0 0.0
        %324 = vmatprep.subr.mxu0 0.0
        %325 = vmatpush1.xpose.msra.mxu0 0.0
        %326 = vmatprep.subr.mxu0 0.0
        %327 = vmatpush1.xpose.msra.mxu0 0.0
        %328 = vmatprep.subr.mxu0 0.0
        %329 = vmatpush1.xpose.msra.mxu0 0.0
        %330 = vmatprep.subr.mxu0 0.0
        %331 = vmatpush1.xpose.msra.mxu0 0.0
        %332 = vmatprep.subr.mxu0 0.0
        %333 = vmatpush1.xpose.msra.mxu0 0.0
        %334 = vmatprep.subr.mxu0 0.0
        %335 = vmatpush1.xpose.msra.mxu0 0.0
        %336 = vmatprep.subr.mxu0 0.0
        %337 = vmatpush1.xpose.msra.mxu0 0.0
        %338 = vmatprep.subr.mxu0 0.0
        %339 = vmatpush1.xpose.msra.mxu0 0.0
        %340 = vmatprep.subr.mxu0 0.0
        %341 = vmatpush1.xpose.msra.mxu0 0.0
        %342 = vmatprep.subr.mxu0 0.0
        %343 = vmatpush1.xpose.msra.mxu0 0.0
        %344 = vmatprep.subr.mxu0 0.0
        %345 = vmatpush1.xpose.msra.mxu0 0.0
        %346 = vmatprep.subr.mxu0 0.0
        %347 = vmatpush1.xpose.msra.mxu0 0.0
        %348 = vmatprep.subr.mxu0 0.0
        %349 = vmatpush1.xpose.msra.mxu0 0.0
        %350 = vmatprep.subr.mxu0 0.0
        %351 = vmatpush1.xpose.msra.mxu0 0.0
        %352 = vmatprep.subr.mxu0 0.0
        %353 = vmatpush1.xpose.msra.mxu0 0.0
        %354 = vmatprep.subr.mxu0 0.0
        %355 = vmatpush1.xpose.msra.mxu0 0.0
        %356 = vmatprep.subr.mxu0 0.0
        %357 = vmatpush1.xpose.msra.mxu0 0.0
        %358 = vmatprep.subr.mxu0 0.0
        %359 = vmatpush1.xpose.msra.mxu0 0.0
        %360 = vmatprep.subr.mxu0 0.0
        %361 = vmatpush1.xpose.msra.mxu0 0.0
        %362 = vmatprep.subr.mxu0 0.0
        %363 = vmatpush1.xpose.msra.mxu0 0.0
        %364 = vmatprep.subr.mxu0 0.0
        %365 = vmatpush1.xpose.msra.mxu0 0.0
        %366 = vmatprep.mubr.f32.mxu0 0.0
        %367 = vmatmul.mubr.f32.gmra.mrb[0].mxu0 %v288
        %v368 = vpop.f32.mrb[0].mxu0
        %v369 = vadd.f32 0.0, %v368
        %v370 = vpop.f32.mrb[0].mxu0
        %371 = vdwg.mxu0
        %372 = vst.msk [vmem:[%s161] sm:$0xff] %vm175, %v369
        %s373 = sand.u32 %s93, 1
        %s374 = scalar_lea.sflag [#allocation3], %s373
        %s375 = sand.u32 %s93, 1
        %s376 = smul.addr %s375, 8
        %s377 = scalar_lea.vmem [#allocation2], %s376
        // Predicated region
        $region33: #{tpu_custom_call.1} parent=31 // pred_check
          %p378 = pneg %p103
        $region34: #{tpu_custom_call.1} parent=31 // pred_check_branch
          %380 = sbr.rel (%p378) target = $region36
        $region35: #{tpu_custom_call.1} parent=31 // pred_region
          %s382 = ssub.s32 128, 128
          %383 = vsyncadd %s374, %s382
          %s384 = smul.addr %s17, 128
          %s385 = scalar_lea.hbm %s3, %s384
          %s387 = sshll.u32 %s377, 4
          %s388 = int_to_ptr.vmem [resolvable:$true] %s387
          %390 = dma.vmem_to_hbm [thread:$0]  %s388, 128, %s385, %s374
        $region36: #{tpu_custom_call.1} parent=31 // pred_fallthru
          _
      $region32: #{tpu_custom_call.1} parent=5 // pred_fallthru
        _
      %p391 = scmp.le.s32.totalorder 2, %s12
      // Predicated region
      $region37: #{tpu_custom_call.1} parent=5 // pred_check
        %p392 = pneg %p391
      $region38: #{tpu_custom_call.1} parent=5 // pred_check_branch
        %394 = sbr.rel (%p392) target = $region40
      $region39: #{tpu_custom_call.1} parent=5 // pred_region
        %s395 = ssub.s32 %s12, 2
        // Predicated region
        $region41: #{tpu_custom_call.1} parent=39 // pred_check
          %p396 = pneg %p109
        $region42: #{tpu_custom_call.1} parent=39 // pred_check_branch
          %398 = sbr.rel (%p396) target = $region44
        $region43: #{tpu_custom_call.1} parent=39 // pred_region
          %s399 = sand.u32 %s94, 1
          %s400 = scalar_lea.sflag [#allocation3], %s399
          %s401 = sand.u32 %s94, 1
          %s402 = smul.addr %s401, 8
          %s403 = scalar_lea.vmem [#allocation2], %s402
          %404 = dma.done %s400, 128
        $region44: #{tpu_custom_call.1} parent=39 // pred_fallthru
          _
      $region40: #{tpu_custom_call.1} parent=5 // pred_fallthru
        _
    $region6: #{tpu_custom_call.1} parent=1 // loop_footer
      %s16 = sadd.s32 1, %s12
    $region7: #{tpu_custom_call.1} parent=1 // loop_footer_branch
      %11 = sbr.rel target = $region3
    $region8: #{tpu_custom_call.1} parent=1 // loop_exit
      _
    %405 = vsyncpa [#allocation3], 1
    %s406 = scalar_lea.sflag [#allocation3], 1
    %407 = vsyncpa %s406, 1

</llo_original>
